<compile_context>
chip_gen: v6e
topology: v6e:2x2x1
jax: 0.10.0
libtpu: 0.0.40
codegen_flags: <defaults>
</compile_context>

<pallas_src>
import functools

import jax
import jax.numpy as jnp
from jax.experimental import pallas as pl
from jax.experimental.pallas import tpu as pltpu

LANE = 128     # TPU lane width
SUBLANE = 8    # TPU sublane width (f32)


def _round_up(n, m):
    return ((n + m - 1) // m) * m


def _padded_bytes(shape, itemsize=4):
    r, c = shape
    return _round_up(r, SUBLANE) * _round_up(c, LANE) * itemsize


# ---------------------------------------------------------------------------
# Kernel: one batch tile, batch on lanes.
#   x_ref (IN_SUB, TB) -> o_ref (ACT_SUB, TB)
# ---------------------------------------------------------------------------
def regnet_kernel(x_ref, w1_ref, b1_ref, w2_ref, b2_ref, w3_ref, b3_ref, o_ref):
    x = x_ref[...]                                                        # (IN_SUB, TB)

    h = jnp.dot(w1_ref[...], x, preferred_element_type=jnp.float32) + b1_ref[...]
    h = jnp.maximum(h, 0.0)                                               # (HID, TB)

    h = jnp.dot(w2_ref[...], h, preferred_element_type=jnp.float32) + b2_ref[...]
    h = jnp.maximum(h, 0.0)                                               # (HID, TB)

    y = jnp.dot(w3_ref[...], h, preferred_element_type=jnp.float32) + b3_ref[...]
    o_ref[...] = y.astype(o_ref.dtype)                                    # (ACT_SUB, TB)


# ---------------------------------------------------------------------------
# One-time parameter preparation (hoisted out of the forward path).
# PyTorch weights are already (out, in), which is exactly the W @ X layout;
# only sublane zero-padding (3->8 inputs, 1->8 actions) is needed.
# ---------------------------------------------------------------------------
def prepare_params(params):
    in_dim = params["w1"].shape[1]
    hid = params["w1"].shape[0]
    act = params["w3"].shape[0]
    in_sub = _round_up(in_dim, SUBLANE)    # 8
    hid_sub = _round_up(hid, SUBLANE)      # 32
    act_sub = _round_up(act, SUBLANE)      # 8

    def pad2(a, rows, cols):
        r, c = a.shape
        return jnp.pad(a.astype(jnp.float32), ((0, rows - r), (0, cols - c)))

    return {
        "w1": pad2(params["w1"], hid_sub, in_sub),                 # (32, 8)
        "b1": pad2(params["b1"].reshape(-1, 1), hid_sub, 1),       # (32, 1)
        "w2": pad2(params["w2"], hid_sub, hid_sub),                # (32, 32)
        "b2": pad2(params["b2"].reshape(-1, 1), hid_sub, 1),       # (32, 1)
        "w3": pad2(params["w3"], act_sub, hid_sub),                # (8, 32)
        "b3": pad2(params["b3"].reshape(-1, 1), act_sub, 1),       # (8, 1)
    }


# ---------------------------------------------------------------------------
# Forward wrapper
# ---------------------------------------------------------------------------
def regnet_forward(x, prep, action_dim, block_batch=2048):
    """x: (B, input_dim) float32; prep: output of prepare_params()."""
    B, in_dim = x.shape
    hid_sub, in_sub = prep["w1"].shape
    act_sub = prep["w3"].shape[0]
    block_batch = _round_up(block_batch, LANE)

    # Batch-on-lanes: (B, in_dim) -> (in_sub, B). Feature rows 3..7 are exact zeros.
    xt = jnp.pad(x.astype(jnp.float32), ((0, 0), (0, in_sub - in_dim))).T   # (in_sub, B)

    # Batch tile on the lane axis: multiple of 128, capped at block_batch, and
    # sized so the grid has >= 2 steps when possible (v7x has 2 TensorCores).
    tb = max(LANE, min(block_batch, _round_up(pl.cdiv(B, 2), LANE)))
    num_steps = pl.cdiv(B, tb)          # ragged last block handled by Pallas masking

    def resident(arr):
        # Same block every grid step -> stays VMEM-resident across the grid.
        return pl.BlockSpec(arr.shape, lambda i: (0, 0))

    resident_shapes = [prep[k].shape for k in ("w1", "b1", "w2", "b2", "w3", "b3")]

    # Honest VMEM request: double-buffered streamed tiles + (default double-
    # buffered) resident params + headroom.  Safe on v7x's 64 MiB VMEM.
    vmem_bytes = (
        2 * (_padded_bytes((in_sub, tb)) + _padded_bytes((act_sub, tb)))
        + 2 * sum(_padded_bytes(s) for s in resident_shapes)
        + (2 << 20)
    )
    vmem_limit = int(min(max(vmem_bytes, 4 << 20), 64 << 20))

    eff_b = num_steps * tb
    flops = 2 * eff_b * (in_sub * hid_sub + hid_sub * hid_sub + hid_sub * act_sub)
    bytes_accessed = 4 * (
        eff_b * (in_sub + act_sub) + sum(r * c for (r, c) in resident_shapes)
    )

    out = pl.pallas_call(
        regnet_kernel,
        out_shape=jax.ShapeDtypeStruct((act_sub, B), jnp.float32),
        grid_spec=pltpu.PrefetchScalarGridSpec(
            num_scalar_prefetch=0,
            grid=(num_steps,),
            in_specs=[
                pl.BlockSpec((in_sub, tb), lambda i: (0, i)),   # x: streamed, batch on lanes
                resident(prep["w1"]),
                resident(prep["b1"]),
                resident(prep["w2"]),
                resident(prep["b2"]),
                resident(prep["w3"]),
                resident(prep["b3"]),
            ],
            out_specs=pl.BlockSpec((act_sub, tb), lambda i: (0, i)),
        ),
        compiler_params=pltpu.CompilerParams(
            dimension_semantics=("parallel",),      # shard batch tiles across TCs (v7x)
            vmem_limit_bytes=vmem_limit,
        ),
        cost_estimate=pl.CostEstimate(
            flops=flops, transcendentals=0, bytes_accessed=bytes_accessed
        ),
    )(xt, prep["w1"], prep["b1"], prep["w2"], prep["b2"], prep["w3"], prep["b3"])

    # Row 0 holds the action; columns are the (unpadded) batch.
    return out[:action_dim].T                       # (B, action_dim)


# ---------------------------------------------------------------------------
# Init + pure-JAX reference (PyTorch convention)
# ---------------------------------------------------------------------------
def init_params(key, input_dim, size, action_dim):
    """Deterministic PyTorch-style init: U(-1/sqrt(fan_in), 1/sqrt(fan_in))."""
    ks = jax.random.split(key, 6)

    def lin(kw, kb, fan_in, fan_out):
        bound = 1.0 / jnp.sqrt(fan_in)
        w = jax.random.uniform(kw, (fan_out, fan_in), jnp.float32, -bound, bound)
        b = jax.random.uniform(kb, (fan_out,), jnp.float32, -bound, bound)
        return w, b

    w1, b1 = lin(ks[0], ks[1], input_dim, size)
    w2, b2 = lin(ks[2], ks[3], size, size)
    w3, b3 = lin(ks[4], ks[5], size, action_dim)
    return {"w1": w1, "b1": b1, "w2": w2, "b2": b2, "w3": w3, "b3": b3}


def regnet_reference(x, p):
    hi = jax.lax.Precision.HIGHEST
    h = jnp.maximum(jnp.dot(x, p["w1"].T, precision=hi) + p["b1"], 0.0)
    h = jnp.maximum(jnp.dot(h, p["w2"].T, precision=hi) + p["b2"], 0.0)
    return jnp.dot(h, p["w3"].T, precision=hi) + p["b3"]


if __name__ == "__main__":
    # Pendulum-v1: observation dim 3, action dim 1, hidden size 32.
    input_dim, size, action_dim = 3, 32, 1

    key = jax.random.PRNGKey(0)
    kx1, kx2, kp = jax.random.split(key, 3)
    params = init_params(kp, input_dim, size, action_dim)
    prep = prepare_params(params)   # one-time pad (hoisted out of forward)

    fwd = jax.jit(functools.partial(regnet_forward, action_dim=action_dim))

    # Single-tile case and a multi-tile / ragged-batch case (exercises edge masking).
    for kx, batch in ((kx1, 8), (kx2, 1030)):
        x = jax.random.normal(kx, (batch, input_dim), jnp.float32)
        out = jax.block_until_ready(fwd(x, prep))
        ref = regnet_reference(x, params)
        assert out.shape == (batch, action_dim)
        assert jnp.allclose(out, ref, atol=1e-4, rtol=1e-4), float(
            jnp.max(jnp.abs(out - ref))
        )

    print("KERNEL_OK")
</pallas_src>

<mosaic_0001>
module attributes {stable_mosaic.version = 11 : i64} {
  func.func @regnet_kernel(%arg0: i32, %arg1: memref<8x128xf32, #tpu.memory_space<vmem>>, %arg2: memref<32x8xf32, #tpu.memory_space<vmem>>, %arg3: memref<32x1xf32, #tpu.memory_space<vmem>>, %arg4: memref<32x32xf32, #tpu.memory_space<vmem>>, %arg5: memref<32x1xf32, #tpu.memory_space<vmem>>, %arg6: memref<8x32xf32, #tpu.memory_space<vmem>>, %arg7: memref<8x1xf32, #tpu.memory_space<vmem>>, %arg8: memref<8x128xf32, #tpu.memory_space<vmem>>) attributes {dimension_semantics = [#tpu.dimension_semantics<parallel>], iteration_bounds = array<i64: 1>, scalar_prefetch = 0 : i64, scratch_operands = 0 : i64, tpu.core_type = #tpu.core_type<tc>, window_params = [{transform_indices = @transform_0, window_bounds = array<i64: 8, 128>}, {pipeline_mode = #tpu.pipeline_mode<synchronous>, transform_indices = @transform_1, window_bounds = array<i64: 32, 8>}, {pipeline_mode = #tpu.pipeline_mode<synchronous>, transform_indices = @transform_2, window_bounds = array<i64: 32, 1>}, {pipeline_mode = #tpu.pipeline_mode<synchronous>, transform_indices = @transform_3, window_bounds = array<i64: 32, 32>}, {pipeline_mode = #tpu.pipeline_mode<synchronous>, transform_indices = @transform_4, window_bounds = array<i64: 32, 1>}, {pipeline_mode = #tpu.pipeline_mode<synchronous>, transform_indices = @transform_5, window_bounds = array<i64: 8, 32>}, {pipeline_mode = #tpu.pipeline_mode<synchronous>, transform_indices = @transform_6, window_bounds = array<i64: 8, 1>}, {transform_indices = @transform_7, window_bounds = array<i64: 8, 128>}]} {
    %c0 = arith.constant 0 : index
    %c0_0 = arith.constant 0 : index
    %0 = vector.load %arg1[%c0, %c0_0] : memref<8x128xf32, #tpu.memory_space<vmem>>, vector<8x128xf32>
    %c0_1 = arith.constant 0 : index
    %c0_2 = arith.constant 0 : index
    %1 = vector.load %arg2[%c0_1, %c0_2] : memref<32x8xf32, #tpu.memory_space<vmem>>, vector<32x8xf32>
    %cst = arith.constant dense<0.000000e+00> : vector<32x128xf32>
    %2 = tpu.matmul %1, %0, %cst {dimension_numbers = #tpu.dot_dimension_numbers<[1], [0], [0], [1], [0, 0, 1, 1], [], []>} : vector<32x8xf32>, vector<8x128xf32>, vector<32x128xf32> -> vector<32x128xf32>
    %c0_3 = arith.constant 0 : index
    %c0_4 = arith.constant 0 : index
    %3 = vector.load %arg3[%c0_3, %c0_4] : memref<32x1xf32, #tpu.memory_space<vmem>>, vector<32x1xf32>
    %4 = vector.broadcast %3 : vector<32x1xf32> to vector<32x128xf32>
    %5 = arith.addf %2, %4 : vector<32x128xf32>
    %cst_5 = arith.constant 0.000000e+00 : f32
    %6 = vector.broadcast %cst_5 : f32 to vector<32x128xf32>
    %7 = arith.maximumf %5, %6 : vector<32x128xf32>
    %c0_6 = arith.constant 0 : index
    %c0_7 = arith.constant 0 : index
    %8 = vector.load %arg4[%c0_6, %c0_7] : memref<32x32xf32, #tpu.memory_space<vmem>>, vector<32x32xf32>
    %cst_8 = arith.constant dense<0.000000e+00> : vector<32x128xf32>
    %9 = tpu.matmul %8, %7, %cst_8 {dimension_numbers = #tpu.dot_dimension_numbers<[1], [0], [0], [1], [0, 0, 1, 1], [], []>} : vector<32x32xf32>, vector<32x128xf32>, vector<32x128xf32> -> vector<32x128xf32>
    %c0_9 = arith.constant 0 : index
    %c0_10 = arith.constant 0 : index
    %10 = vector.load %arg5[%c0_9, %c0_10] : memref<32x1xf32, #tpu.memory_space<vmem>>, vector<32x1xf32>
    %11 = vector.broadcast %10 : vector<32x1xf32> to vector<32x128xf32>
    %12 = arith.addf %9, %11 : vector<32x128xf32>
    %cst_11 = arith.constant 0.000000e+00 : f32
    %13 = vector.broadcast %cst_11 : f32 to vector<32x128xf32>
    %14 = arith.maximumf %12, %13 : vector<32x128xf32>
    %c0_12 = arith.constant 0 : index
    %c0_13 = arith.constant 0 : index
    %15 = vector.load %arg6[%c0_12, %c0_13] : memref<8x32xf32, #tpu.memory_space<vmem>>, vector<8x32xf32>
    %cst_14 = arith.constant dense<0.000000e+00> : vector<8x128xf32>
    %16 = tpu.matmul %15, %14, %cst_14 {dimension_numbers = #tpu.dot_dimension_numbers<[1], [0], [0], [1], [0, 0, 1, 1], [], []>} : vector<8x32xf32>, vector<32x128xf32>, vector<8x128xf32> -> vector<8x128xf32>
    %c0_15 = arith.constant 0 : index
    %c0_16 = arith.constant 0 : index
    %17 = vector.load %arg7[%c0_15, %c0_16] : memref<8x1xf32, #tpu.memory_space<vmem>>, vector<8x1xf32>
    %18 = vector.broadcast %17 : vector<8x1xf32> to vector<8x128xf32>
    %19 = arith.addf %16, %18 : vector<8x128xf32>
    %c0_17 = arith.constant 0 : index
    %c0_18 = arith.constant 0 : index
    %20 = vector.load %arg8[%c0_17, %c0_18] : memref<8x128xf32, #tpu.memory_space<vmem>>, vector<8x128xf32>
    tpu.vector_store %arg8[%c0_17, %c0_18], %19 {strides = array<i32>} : memref<8x128xf32, #tpu.memory_space<vmem>>, vector<8x128xf32>,
    return
  }
  func.func @transform_0(%arg0: i32) -> (i32, i32) {
    %c0_i32 = arith.constant 0 : i32
    %c0_i32_0 = arith.constant 0 : i32
    return %c0_i32, %arg0 : i32, i32
  }
  func.func @transform_1(%arg0: i32) -> (i32, i32) {
    %c0_i32 = arith.constant 0 : i32
    %c0_i32_0 = arith.constant 0 : i32
    %c0_i32_1 = arith.constant 0 : i32
    return %c0_i32, %c0_i32_0 : i32, i32
  }
  func.func @transform_2(%arg0: i32) -> (i32, i32) {
    %c0_i32 = arith.constant 0 : i32
    %c0_i32_0 = arith.constant 0 : i32
    %c0_i32_1 = arith.constant 0 : i32
    return %c0_i32, %c0_i32_0 : i32, i32
  }
  func.func @transform_3(%arg0: i32) -> (i32, i32) {
    %c0_i32 = arith.constant 0 : i32
    %c0_i32_0 = arith.constant 0 : i32
    %c0_i32_1 = arith.constant 0 : i32
    return %c0_i32, %c0_i32_0 : i32, i32
  }
  func.func @transform_4(%arg0: i32) -> (i32, i32) {
    %c0_i32 = arith.constant 0 : i32
    %c0_i32_0 = arith.constant 0 : i32
    %c0_i32_1 = arith.constant 0 : i32
    return %c0_i32, %c0_i32_0 : i32, i32
  }
  func.func @transform_5(%arg0: i32) -> (i32, i32) {
    %c0_i32 = arith.constant 0 : i32
    %c0_i32_0 = arith.constant 0 : i32
    %c0_i32_1 = arith.constant 0 : i32
    return %c0_i32, %c0_i32_0 : i32, i32
  }
  func.func @transform_6(%arg0: i32) -> (i32, i32) {
    %c0_i32 = arith.constant 0 : i32
    %c0_i32_0 = arith.constant 0 : i32
    %c0_i32_1 = arith.constant 0 : i32
    return %c0_i32, %c0_i32_0 : i32, i32
  }
  func.func @transform_7(%arg0: i32) -> (i32, i32) {
    %c0_i32 = arith.constant 0 : i32
    %c0_i32_0 = arith.constant 0 : i32
    return %c0_i32, %arg0 : i32, i32
  }
}

</mosaic_0001>

<llo_original>
// kernel: regnet_forward.1
$region0: #{regnet_forward.1}
  #allocation0 [shape = 'u32[]', space=smem, size = 0x4, offset = 0x4, fixed_abs, tag = 'smem constant byte address 0x4 - core index']
  #allocation1 [shape = 'u32[144,128]{1,0:T(1,128)}', space=vmem, size = 0x12000, scoped, tag = 'internal scratch']
  %s0 = inlined_call_operand.vmem [shape: f32[8,8], index: 0, kind: input, shape index: {}]
  %s1 = inlined_call_operand.vmem [shape: f32[32,8], index: 1, kind: input, shape index: {}]
  %s2 = inlined_call_operand.vmem [shape: f32[32,1], index: 2, kind: input, shape index: {}]
  %s3 = inlined_call_operand.vmem [shape: f32[32,32], index: 3, kind: input, shape index: {}]
  %s4 = inlined_call_operand.vmem [shape: f32[32,1], index: 4, kind: input, shape index: {}]
  %s5 = inlined_call_operand.vmem [shape: f32[8,32], index: 5, kind: input, shape index: {}]
  %s6 = inlined_call_operand.vmem [shape: f32[8,1], index: 6, kind: input, shape index: {}]
  %s7 = inlined_call_operand.vmem [shape: f32[8,8], index: 7, kind: output, shape index: {}]
  %s8 = sld [smem:[#allocation0]]
  $region38: #{regnet_forward.1} parent=0
    _
  %s10 = ssub.s32 1, %s8
  %s11 = scalar_select 0, %s10, %s8
  // Predicated region
  $region2: #{regnet_forward.1} parent=0 // pred_check
    _
  $region3: #{regnet_forward.1} parent=0 // pred_check_branch
    %13 = sbr.rel (0) target = $region5
  $region4: #{regnet_forward.1} parent=0 // pred_region
    _
  $region5: #{regnet_forward.1} parent=0 // pred_fallthru
    _
  // Predicated region
  $region6: #{regnet_forward.1} parent=0 // pred_check
    _
  $region7: #{regnet_forward.1} parent=0 // pred_check_branch
    %15 = sbr.rel (0) target = $region9
  $region8: #{regnet_forward.1} parent=0 // pred_region
    _
  $region9: #{regnet_forward.1} parent=0 // pred_fallthru
    _
  // Predicated region
  $region10: #{regnet_forward.1} parent=0 // pred_check
    _
  $region11: #{regnet_forward.1} parent=0 // pred_check_branch
    %17 = sbr.rel (0) target = $region13
  $region12: #{regnet_forward.1} parent=0 // pred_region
    _
  $region13: #{regnet_forward.1} parent=0 // pred_fallthru
    _
  // Predicated region
  $region14: #{regnet_forward.1} parent=0 // pred_check
    _
  $region15: #{regnet_forward.1} parent=0 // pred_check_branch
    %19 = sbr.rel (0) target = $region17
  $region16: #{regnet_forward.1} parent=0 // pred_region
    _
  $region17: #{regnet_forward.1} parent=0 // pred_fallthru
    _
  // Predicated region
  $region18: #{regnet_forward.1} parent=0 // pred_check
    _
  $region19: #{regnet_forward.1} parent=0 // pred_check_branch
    %21 = sbr.rel (0) target = $region21
  $region20: #{regnet_forward.1} parent=0 // pred_region
    _
  $region21: #{regnet_forward.1} parent=0 // pred_fallthru
    _
  // Predicated region
  $region22: #{regnet_forward.1} parent=0 // pred_check
    _
  $region23: #{regnet_forward.1} parent=0 // pred_check_branch
    %23 = sbr.rel (0) target = $region25
  $region24: #{regnet_forward.1} parent=0 // pred_region
    _
  $region25: #{regnet_forward.1} parent=0 // pred_fallthru
    _
  // Predicated region
  $region26: #{regnet_forward.1} parent=0 // pred_check
    _
  $region27: #{regnet_forward.1} parent=0 // pred_check_branch
    %25 = sbr.rel (0) target = $region29
  $region28: #{regnet_forward.1} parent=0 // pred_region
    _
  $region29: #{regnet_forward.1} parent=0 // pred_fallthru
    _
  %v26 = vld [vmem:[%s0] sm:$0xff]
  %v27 = vld [vmem:[%s1] sm:$0xff]
  %v28 = vld [vmem:[%s1 + $0x8] sm:$0xff]
  %v29 = vld [vmem:[%s1 + $0x10] sm:$0xff]
  %v30 = vld [vmem:[%s1 + $0x18] sm:$0xff]
  %v31 = vld [vmem:[%s2] sm:$0xff]
  %v32 = vld [vmem:[%s2 + $0x8] sm:$0xff]
  %v33 = vld [vmem:[%s2 + $0x10] sm:$0xff]
  %v34 = vld [vmem:[%s2 + $0x18] sm:$0xff]
  %36 = vset.pattern.permute.xlu0 0
  %37 = vperm.xlu0 %36, %v31
  %v38 = vpop.permute.xlu0 %37
  %41 = vset.pattern.permute.xlu0 0
  %42 = vperm.xlu0 %41, %v32
  %v43 = vpop.permute.xlu0 %42
  %46 = vset.pattern.permute.xlu0 0
  %47 = vperm.xlu0 %46, %v33
  %v48 = vpop.permute.xlu0 %47
  %51 = vset.pattern.permute.xlu0 0
  %52 = vperm.xlu0 %51, %v34
  %v53 = vpop.permute.xlu0 %52
  %vm55 = vcmask 64512
  %v57 = vsel %vm55, %v27, 0
  %v60 = vsel %vm55, %v28, 0
  %v63 = vsel %vm55, %v29, 0
  %v66 = vsel %vm55, %v30, 0
  %68 = vmatprep.subr.mxu0 0.0
  %69 = vmatpush1.msra.mxu0 0.0
  %70 = vmatprep.subr.mxu0 0.0
  %71 = vmatpush1.msra.mxu0 0.0
  %72 = vmatprep.subr.mxu0 0.0
  %73 = vmatpush1.msra.mxu0 0.0
  %74 = vmatprep.subr.mxu0 0.0
  %75 = vmatpush1.msra.mxu0 0.0
  %76 = vmatprep.subr.mxu0 0.0
  %77 = vmatpush1.msra.mxu0 0.0
  %78 = vmatprep.subr.mxu0 0.0
  %79 = vmatpush1.msra.mxu0 0.0
  %80 = vmatprep.subr.mxu0 0.0
  %81 = vmatpush1.msra.mxu0 0.0
  %82 = vmatprep.subr.mxu0 0.0
  %83 = vmatpush1.msra.mxu0 0.0
  %84 = vmatprep.subr.mxu0 0.0
  %85 = vmatpush1.msra.mxu0 0.0
  %86 = vmatprep.subr.mxu0 0.0
  %87 = vmatpush1.msra.mxu0 0.0
  %88 = vmatprep.subr.mxu0 0.0
  %89 = vmatpush1.msra.mxu0 0.0
  %90 = vmatprep.subr.mxu0 0.0
  %91 = vmatpush1.msra.mxu0 0.0
  %92 = vmatprep.subr.mxu0 0.0
  %93 = vmatpush1.msra.mxu0 0.0
  %94 = vmatprep.subr.mxu0 0.0
  %95 = vmatpush1.msra.mxu0 0.0
  %96 = vmatprep.subr.mxu0 0.0
  %97 = vmatpush1.msra.mxu0 0.0
  %98 = vmatprep.subr.mxu0 0.0
  %99 = vmatpush1.msra.mxu0 %v26
  %100 = vmatprep.subr.mxu0 0.0
  %101 = vmatpush2.msra.mxu0 0.0
  %102 = vmatprep.subr.mxu0 0.0
  %103 = vmatpush2.msra.mxu0 0.0
  %104 = vmatprep.subr.mxu0 0.0
  %105 = vmatpush2.msra.mxu0 0.0
  %106 = vmatprep.subr.mxu0 0.0
  %107 = vmatpush2.msra.mxu0 0.0
  %108 = vmatprep.subr.mxu0 0.0
  %109 = vmatpush2.msra.mxu0 0.0
  %110 = vmatprep.subr.mxu0 0.0
  %111 = vmatpush2.msra.mxu0 0.0
  %112 = vmatprep.subr.mxu0 0.0
  %113 = vmatpush2.msra.mxu0 0.0
  %114 = vmatprep.subr.mxu0 0.0
  %115 = vmatpush2.msra.mxu0 0.0
  %116 = vmatprep.subr.mxu0 0.0
  %117 = vmatpush2.msra.mxu0 0.0
  %118 = vmatprep.subr.mxu0 0.0
  %119 = vmatpush2.msra.mxu0 0.0
  %120 = vmatprep.subr.mxu0 0.0
  %121 = vmatpush2.msra.mxu0 0.0
  %122 = vmatprep.subr.mxu0 0.0
  %123 = vmatpush2.msra.mxu0 0.0
  %124 = vmatprep.subr.mxu0 0.0
  %125 = vmatpush2.msra.mxu0 0.0
  %126 = vmatprep.subr.mxu0 0.0
  %127 = vmatpush2.msra.mxu0 0.0
  %128 = vmatprep.subr.mxu0 0.0
  %129 = vmatpush2.msra.mxu0 0.0
  %130 = vmatprep.subr.mxu0 0.0
  %131 = vmatpush2.msra.mxu0 0.0
  %132 = vmatprep.mubr.f32.mxu0 0.0
  %133 = vmatmul.mubr.f32.gmra.mxu0 %v57
  %v134 = vpop.f32.mrf.mxu0
  %v135 = vadd.f32 %v38, %v134
  %v136 = vpop.f32.mrf.mxu0
  %137 = vmatprep.mubr.f32.mxu0 0.0
  %138 = vmatmul.mubr.f32.gmra.mxu0 %v60
  %v139 = vpop.f32.mrf.mxu0
  %v140 = vadd.f32 %v43, %v139
  %v141 = vpop.f32.mrf.mxu0
  %142 = vmatprep.mubr.f32.mxu0 0.0
  %143 = vmatmul.mubr.f32.gmra.mxu0 %v63
  %v144 = vpop.f32.mrf.mxu0
  %v145 = vadd.f32 %v48, %v144
  %v146 = vpop.f32.mrf.mxu0
  %147 = vmatprep.mubr.f32.mxu0 0.0
  %148 = vmatmul.mubr.f32.gmra.mxu0 %v66
  %v149 = vpop.f32.mrf.mxu0
  %v150 = vadd.f32 %v53, %v149
  %v151 = vpop.f32.mrf.mxu0
  %152 = vdwg.mxu0
  %v153 = vmax.f32 %v135, 0.0
  %v154 = vmax.f32 %v140, 0.0
  %v155 = vmax.f32 %v145, 0.0
  %v156 = vmax.f32 %v150, 0.0
  %v157 = vld [vmem:[%s3] sm:$0xff]
  %v158 = vld [vmem:[%s3 + $0x8] sm:$0xff]
  %v159 = vld [vmem:[%s3 + $0x10] sm:$0xff]
  %v160 = vld [vmem:[%s3 + $0x18] sm:$0xff]
  %v161 = vld [vmem:[%s4] sm:$0xff]
  %v162 = vld [vmem:[%s4 + $0x8] sm:$0xff]
  %v163 = vld [vmem:[%s4 + $0x10] sm:$0xff]
  %v164 = vld [vmem:[%s4 + $0x18] sm:$0xff]
  %166 = vset.pattern.permute.xlu0 0
  %167 = vperm.xlu0 %166, %v161
  %v168 = vpop.permute.xlu0 %167
  %171 = vset.pattern.permute.xlu0 0
  %172 = vperm.xlu0 %171, %v162
  %v173 = vpop.permute.xlu0 %172
  %176 = vset.pattern.permute.xlu0 0
  %177 = vperm.xlu0 %176, %v163
  %v178 = vpop.permute.xlu0 %177
  %181 = vset.pattern.permute.xlu0 0
  %182 = vperm.xlu0 %181, %v164
  %v183 = vpop.permute.xlu0 %182
  %vm185 = vcmask 261120
  %v187 = vsel %vm185, %v157, 0
  %v190 = vsel %vm185, %v158, 0
  %v193 = vsel %vm185, %v159, 0
  %v196 = vsel %vm185, %v160, 0
  %198 = vmatprep.subr.mxu0 0.0
  %199 = vmatpush1.msra.mxu0 0.0
  %200 = vmatprep.subr.mxu0 0.0
  %201 = vmatpush1.msra.mxu0 0.0
  %202 = vmatprep.subr.mxu0 0.0
  %203 = vmatpush1.msra.mxu0 0.0
  %204 = vmatprep.subr.mxu0 0.0
  %205 = vmatpush1.msra.mxu0 0.0
  %206 = vmatprep.subr.mxu0 0.0
  %207 = vmatpush1.msra.mxu0 0.0
  %208 = vmatprep.subr.mxu0 0.0
  %209 = vmatpush1.msra.mxu0 0.0
  %210 = vmatprep.subr.mxu0 0.0
  %211 = vmatpush1.msra.mxu0 0.0
  %212 = vmatprep.subr.mxu0 0.0
  %213 = vmatpush1.msra.mxu0 0.0
  %214 = vmatprep.subr.mxu0 0.0
  %215 = vmatpush1.msra.mxu0 0.0
  %216 = vmatprep.subr.mxu0 0.0
  %217 = vmatpush1.msra.mxu0 0.0
  %218 = vmatprep.subr.mxu0 0.0
  %219 = vmatpush1.msra.mxu0 0.0
  %220 = vmatprep.subr.mxu0 0.0
  %221 = vmatpush1.msra.mxu0 0.0
  %222 = vmatprep.subr.mxu0 0.0
  %223 = vmatpush1.msra.mxu0 %v156
  %224 = vmatprep.subr.mxu0 0.0
  %225 = vmatpush1.msra.mxu0 %v155
  %226 = vmatprep.subr.mxu0 0.0
  %227 = vmatpush1.msra.mxu0 %v154
  %228 = vmatprep.subr.mxu0 0.0
  %229 = vmatpush1.msra.mxu0 %v153
  %230 = vmatprep.subr.mxu0 0.0
  %231 = vmatpush2.msra.mxu0 0.0
  %232 = vmatprep.subr.mxu0 0.0
  %233 = vmatpush2.msra.mxu0 0.0
  %234 = vmatprep.subr.mxu0 0.0
  %235 = vmatpush2.msra.mxu0 0.0
  %236 = vmatprep.subr.mxu0 0.0
  %237 = vmatpush2.msra.mxu0 0.0
  %238 = vmatprep.subr.mxu0 0.0
  %239 = vmatpush2.msra.mxu0 0.0
  %240 = vmatprep.subr.mxu0 0.0
  %241 = vmatpush2.msra.mxu0 0.0
  %242 = vmatprep.subr.mxu0 0.0
  %243 = vmatpush2.msra.mxu0 0.0
  %244 = vmatprep.subr.mxu0 0.0
  %245 = vmatpush2.msra.mxu0 0.0
  %246 = vmatprep.subr.mxu0 0.0
  %247 = vmatpush2.msra.mxu0 0.0
  %248 = vmatprep.subr.mxu0 0.0
  %249 = vmatpush2.msra.mxu0 0.0
  %250 = vmatprep.subr.mxu0 0.0
  %251 = vmatpush2.msra.mxu0 0.0
  %252 = vmatprep.subr.mxu0 0.0
  %253 = vmatpush2.msra.mxu0 0.0
  %254 = vmatprep.subr.mxu0 0.0
  %255 = vmatpush2.msra.mxu0 0.0
  %256 = vmatprep.subr.mxu0 0.0
  %257 = vmatpush2.msra.mxu0 0.0
  %258 = vmatprep.subr.mxu0 0.0
  %259 = vmatpush2.msra.mxu0 0.0
  %260 = vmatprep.subr.mxu0 0.0
  %261 = vmatpush2.msra.mxu0 0.0
  %262 = vmatprep.mubr.f32.mxu0 0.0
  %263 = vmatmul.mubr.f32.gmra.mxu0 %v187
  %v264 = vpop.f32.mrf.mxu0
  %v265 = vadd.f32 %v168, %v264
  %v266 = vpop.f32.mrf.mxu0
  %267 = vmatprep.mubr.f32.mxu0 0.0
  %268 = vmatmul.mubr.f32.gmra.mxu0 %v190
  %v269 = vpop.f32.mrf.mxu0
  %v270 = vadd.f32 %v173, %v269
  %v271 = vpop.f32.mrf.mxu0
  %272 = vmatprep.mubr.f32.mxu0 0.0
  %273 = vmatmul.mubr.f32.gmra.mxu0 %v193
  %v274 = vpop.f32.mrf.mxu0
  %v275 = vadd.f32 %v178, %v274
  %v276 = vpop.f32.mrf.mxu0
  %277 = vmatprep.mubr.f32.mxu0 0.0
  %278 = vmatmul.mubr.f32.gmra.mxu0 %v196
  %v279 = vpop.f32.mrf.mxu0
  %v280 = vadd.f32 %v183, %v279
  %v281 = vpop.f32.mrf.mxu0
  %282 = vdwg.mxu0
  %v283 = vmax.f32 %v265, 0.0
  %v284 = vmax.f32 %v270, 0.0
  %v285 = vmax.f32 %v275, 0.0
  %v286 = vmax.f32 %v280, 0.0
  %v287 = vld [vmem:[%s5] sm:$0xff]
  %v288 = vld [vmem:[%s6] sm:$0xff]
  %290 = vset.pattern.permute.xlu0 0
  %291 = vperm.xlu0 %290, %v288
  %v292 = vpop.permute.xlu0 %291
  %v295 = vsel %vm185, %v287, 0
  %297 = vmatprep.subr.mxu0 0.0
  %298 = vmatpush1.msra.mxu0 0.0
  %299 = vmatprep.subr.mxu0 0.0
  %300 = vmatpush1.msra.mxu0 0.0
  %301 = vmatprep.subr.mxu0 0.0
  %302 = vmatpush1.msra.mxu0 0.0
  %303 = vmatprep.subr.mxu0 0.0
  %304 = vmatpush1.msra.mxu0 0.0
  %305 = vmatprep.subr.mxu0 0.0
  %306 = vmatpush1.msra.mxu0 0.0
  %307 = vmatprep.subr.mxu0 0.0
  %308 = vmatpush1.msra.mxu0 0.0
  %309 = vmatprep.subr.mxu0 0.0
  %310 = vmatpush1.msra.mxu0 0.0
  %311 = vmatprep.subr.mxu0 0.0
  %312 = vmatpush1.msra.mxu0 0.0
  %313 = vmatprep.subr.mxu0 0.0
  %314 = vmatpush1.msra.mxu0 0.0
  %315 = vmatprep.subr.mxu0 0.0
  %316 = vmatpush1.msra.mxu0 0.0
  %317 = vmatprep.subr.mxu0 0.0
  %318 = vmatpush1.msra.mxu0 0.0
  %319 = vmatprep.subr.mxu0 0.0
  %320 = vmatpush1.msra.mxu0 0.0
  %321 = vmatprep.subr.mxu0 0.0
  %322 = vmatpush1.msra.mxu0 %v286
  %323 = vmatprep.subr.mxu0 0.0
  %324 = vmatpush1.msra.mxu0 %v285
  %325 = vmatprep.subr.mxu0 0.0
  %326 = vmatpush1.msra.mxu0 %v284
  %327 = vmatprep.subr.mxu0 0.0
  %328 = vmatpush1.msra.mxu0 %v283
  %329 = vmatprep.subr.mxu0 0.0
  %330 = vmatpush2.msra.mxu0 0.0
  %331 = vmatprep.subr.mxu0 0.0
  %332 = vmatpush2.msra.mxu0 0.0
  %333 = vmatprep.subr.mxu0 0.0
  %334 = vmatpush2.msra.mxu0 0.0
  %335 = vmatprep.subr.mxu0 0.0
  %336 = vmatpush2.msra.mxu0 0.0
  %337 = vmatprep.subr.mxu0 0.0
  %338 = vmatpush2.msra.mxu0 0.0
  %339 = vmatprep.subr.mxu0 0.0
  %340 = vmatpush2.msra.mxu0 0.0
  %341 = vmatprep.subr.mxu0 0.0
  %342 = vmatpush2.msra.mxu0 0.0
  %343 = vmatprep.subr.mxu0 0.0
  %344 = vmatpush2.msra.mxu0 0.0
  %345 = vmatprep.subr.mxu0 0.0
  %346 = vmatpush2.msra.mxu0 0.0
  %347 = vmatprep.subr.mxu0 0.0
  %348 = vmatpush2.msra.mxu0 0.0
  %349 = vmatprep.subr.mxu0 0.0
  %350 = vmatpush2.msra.mxu0 0.0
  %351 = vmatprep.subr.mxu0 0.0
  %352 = vmatpush2.msra.mxu0 0.0
  %353 = vmatprep.subr.mxu0 0.0
  %354 = vmatpush2.msra.mxu0 0.0
  %355 = vmatprep.subr.mxu0 0.0
  %356 = vmatpush2.msra.mxu0 0.0
  %357 = vmatprep.subr.mxu0 0.0
  %358 = vmatpush2.msra.mxu0 0.0
  %359 = vmatprep.subr.mxu0 0.0
  %360 = vmatpush2.msra.mxu0 0.0
  %361 = vmatprep.mubr.f32.mxu0 0.0
  %362 = vmatmul.mubr.f32.gmra.mxu0 %v295
  %v363 = vpop.f32.mrf.mxu0
  %v364 = vadd.f32 %v292, %v363
  %v365 = vpop.f32.mrf.mxu0
  %366 = vdwg.mxu0
  %367 = vst [vmem:[%s7] sm:$0xff] %v364
  // Predicated region
  $region30: #{regnet_forward.1} parent=0 // pred_check
    _
  $region31: #{regnet_forward.1} parent=0 // pred_check_branch
    %369 = sbr.rel (0) target = $region33
  $region32: #{regnet_forward.1} parent=0 // pred_region
    _
  $region33: #{regnet_forward.1} parent=0 // pred_fallthru
    _
  // Predicated region
  $region34: #{regnet_forward.1} parent=0 // pred_check
    _
  $region35: #{regnet_forward.1} parent=0 // pred_check_branch
    %371 = sbr.rel (0) target = $region37
  $region36: #{regnet_forward.1} parent=0 // pred_region
    _
  $region37: #{regnet_forward.1} parent=0 // pred_fallthru
    _

</llo_original>
